<compile_context>
chip_gen: v6e
topology: v6e:2x2x1
jax: 0.10.0
libtpu: 0.0.40
codegen_flags: <defaults>
</compile_context>

<pallas_src>
import math

import numpy as np

import jax
import jax.numpy as jnp
from jax.experimental import pallas as pl
from jax.experimental.pallas import tpu as pltpu


# --------------------------------------------------------------------------
# Per-generation tiling budget
# --------------------------------------------------------------------------
def _chip_budget():
    """Returns (per-x-buffer target bytes, vmem_limit_bytes) for this TPU gen."""
    kind = ""
    try:
        kind = jax.devices()[0].device_kind.lower()
    except Exception:
        pass
    if "v7" in kind:
        # 3.2 TB/s HBM -> need big steps to amortize ~0.35us step overhead,
        # but only 64 MiB physical VMEM per TensorCore.
        return 8 << 20, 48 << 20
    if "v5 lite" in kind or "v5e" in kind or "v5litepod" in kind:
        # 16 MiB default scoped VMEM; ~0.8 TB/s HBM so 3 MiB already amortizes.
        return 3 << 20, 32 << 20
    # v6e and default.
    return 4 << 20, 64 << 20


def _plan(R, L, x_itemsize, out_itemsize):
    """Pick (row_tile, lane_tile, vmem_limit) for a (R, L) lane-dense stream."""
    target, vmem_limit = _chip_budget()
    w = max(x_itemsize, out_itemsize, 1)
    min_rows = R if R < 8 else 8

    # Lane tiling only when a minimal-rows block would exceed the target and
    # the lane dim can legally be split into 128-multiples (otherwise the
    # block must span the full lane extent).
    tl = L
    if L % 128 == 0 and min_rows * L * w > target:
        tl = (target // max(min_rows * w, 1)) // 128 * 128
        tl = max(128, min(tl, L))

    # Row tiling (multiple of 8, or the full row extent).
    tr_budget = max(1, target // max(1, tl * w))
    if tr_budget >= R or R <= 8:
        tr = R
    else:
        tr = max(8, (min(tr_budget, R) // 8) * 8)
    return tr, tl, vmem_limit


# --------------------------------------------------------------------------
# Kernels
# --------------------------------------------------------------------------
def _make_pow_kernel(out_dtype, mode, n_static=None):
    cast_out = jnp.dtype(out_dtype) != jnp.dtype(jnp.float32)

    if mode == "static_int":
        n = int(n_static)

        def kernel(x_ref, o_ref):
            xv = x_ref[...]
            if xv.dtype != jnp.float32:
                xv = xv.astype(jnp.float32)
            # Repeated squaring on the VPU: no EUP exp/log, exact for negative
            # bases and 0**0 (matches torch).  Fully unrolled at trace time.
            m = abs(n)
            acc = jnp.ones_like(xv)
            base = xv
            while m:
                if m & 1:
                    acc = acc * base
                m >>= 1
                if m:
                    base = base * base
            if n < 0:
                acc = 1.0 / acc
            o_ref[...] = acc.astype(out_dtype) if cast_out else acc

        return kernel

    if mode == "smem_scalar":

        def kernel(x_ref, e_ref, o_ref):
            xv = x_ref[...]
            if xv.dtype != jnp.float32:
                xv = xv.astype(jnp.float32)
            r = jnp.power(xv, e_ref[0, 0])
            o_ref[...] = r.astype(out_dtype) if cast_out else r

        return kernel

    # "row" (exponent tile (1, TL), sublane-broadcast) or "full" ((TR, TL)).
    def kernel(x_ref, e_ref, o_ref):
        xv = x_ref[...]
        ev = e_ref[...]
        if xv.dtype != jnp.float32:
            xv = xv.astype(jnp.float32)
        if ev.dtype != jnp.float32:  # trace-time no-op when pre-cast in wrapper
            ev = ev.astype(jnp.float32)
        r = jnp.power(xv, ev)
        o_ref[...] = r.astype(out_dtype) if cast_out else r

    return kernel


def _pow_call(x2, e2, out_dtype, mode, n_static=None):
    """Run the elementwise power kernel on a lane-dense (R, L) view of x."""
    R, L = x2.shape
    tr, tl, vmem_limit = _plan(R, L, x2.dtype.itemsize, jnp.dtype(out_dtype).itemsize)
    grid = (pl.cdiv(R, tr), pl.cdiv(L, tl))

    x_spec = pl.BlockSpec((tr, tl), lambda i, j: (i, j))
    o_spec = pl.BlockSpec((tr, tl), lambda i, j: (i, j))

    kernel = _make_pow_kernel(out_dtype, mode, n_static)
    cparams = pltpu.CompilerParams(
        # Pure streaming elementwise op: both grid axes are fully independent
        # (lets v7x shard them across its 2 TensorCores).
        dimension_semantics=("parallel", "parallel"),
        vmem_limit_bytes=vmem_limit,
    )
    out_sd = jax.ShapeDtypeStruct((R, L), out_dtype)

    if mode == "static_int":
        return pl.pallas_call(
            kernel, out_shape=out_sd, grid=grid,
            in_specs=[x_spec], out_specs=o_spec, compiler_params=cparams,
        )(x2)

    if mode == "smem_scalar":
        # (1,1) scalar lives in SMEM: no exponent HBM stream at all.
        e_spec = pl.BlockSpec(memory_space=pltpu.MemorySpace.SMEM)
    elif mode == "row":
        # Tiny row-exponent tile; constant row-block index -> DMA'd once per
        # lane block and VMEM-resident across all row steps.
        e_spec = pl.BlockSpec((1, tl), lambda i, j: (0, j))
    else:  # "full"
        e_spec = pl.BlockSpec((tr, tl), lambda i, j: (i, j))

    return pl.pallas_call(
        kernel, out_shape=out_sd, grid=grid,
        in_specs=[x_spec, e_spec], out_specs=o_spec, compiler_params=cparams,
    )(x2, e2)


# --------------------------------------------------------------------------
# Wrapper
# --------------------------------------------------------------------------
def _static_float(e):
    """Python float if the exponent is a statically-known scalar, else None."""
    if isinstance(e, (bool, int, float)):
        return float(e)
    try:
        arr = np.asarray(e)  # raises for tracers
        if arr.size == 1:
            return float(arr.reshape(()))
    except Exception:
        pass
    return None


def _lane_dense_2d(x):
    """Flatten x to a lane-dense (rows, cols) view (cols a multiple of 128 if possible)."""
    n = x.size
    cols = next((c for c in (8192, 4096, 2048, 1024, 512, 256, 128) if n % c == 0), None)
    if cols is None:
        cols = x.shape[-1] if (x.ndim >= 1 and x.shape[-1] > 0) else max(n, 1)
    rows = max(n // max(cols, 1), 1)
    return x.reshape(rows, cols)


def power_broadcast(x, exponent):
    """x ** exponent with torch-style broadcasting, computed in Pallas TPU kernels."""
    x = jnp.asarray(x)
    e_static = _static_float(exponent)
    exponent = jnp.asarray(exponent)
    out_shape = jnp.broadcast_shapes(x.shape, exponent.shape)
    out_dtype = jnp.result_type(x.dtype, exponent.dtype)

    if math.prod(out_shape) == 0:
        return jnp.zeros(out_shape, out_dtype)

    # ---- Scalar exponent: never stream it from HBM. ----
    if exponent.size == 1 and math.prod(out_shape) == x.size:
        x2 = _lane_dense_2d(x)
        if e_static is not None and float(e_static).is_integer() and abs(e_static) <= 64:
            out2 = _pow_call(x2, None, out_dtype, mode="static_int",
                             n_static=int(e_static))
        else:
            e_sm = exponent.reshape(1, 1).astype(jnp.float32)
            out2 = _pow_call(x2, e_sm, out_dtype, mode="smem_scalar")
        return out2.reshape(out_shape)

    # ---- Fast path (the module's typical case): exponent broadcasts only over
    # x's leading dims, e.g. x (B,C,H,W) ** exponent (H,W).  Flatten lane-dense:
    # x -> (B*C, H*W), exponent -> (1, H*W) (pre-cast to f32, VMEM-resident).
    e_core = exponent.shape
    while e_core and e_core[0] == 1:
        e_core = e_core[1:]
    L = math.prod(e_core) if e_core else 1
    fast = (
        out_shape == x.shape
        and len(e_core) <= x.ndim
        and x.shape[x.ndim - len(e_core):] == e_core
        and L >= 128  # full-extent lane block is legal even if L % 128 != 0
    )
    if fast:
        R = x.size // L
        e2 = exponent.reshape(1, L).astype(jnp.float32)
        out2 = _pow_call(x.reshape(R, L), e2, out_dtype, mode="row")
        return out2.reshape(out_shape)

    # ---- General fallback: materialize the broadcast outside the kernel and
    # run the same lane-dense elementwise kernel on a flattened 2-D view.
    xb = jnp.broadcast_to(x, out_shape)
    eb = jnp.broadcast_to(exponent, out_shape)
    n = xb.size
    cols = next((c for c in (8192, 4096, 2048, 1024, 512, 256, 128) if n % c == 0), None)
    if cols is None:
        cols = out_shape[-1] if len(out_shape) >= 1 and out_shape[-1] > 0 else n
    rows = n // cols
    out2 = _pow_call(xb.reshape(rows, cols), eb.reshape(rows, cols), out_dtype,
                     mode="full")
    return out2.reshape(out_shape)


# --------------------------------------------------------------------------
# Self-test
# --------------------------------------------------------------------------
if __name__ == "__main__":
    key = jax.random.PRNGKey(0)
    kx, ke, kc = jax.random.split(key, 3)

    # Shapes consistent with the module: x is (B, C, H, W), exponent is (H, W).
    B, C, H, W = 2, 4, 16, 16
    # Positive base so fractional exponents are well-defined (matches torch).
    x = jax.random.uniform(kx, (B, C, H, W), dtype=jnp.float32, minval=0.1, maxval=2.0)
    exponent = jax.random.uniform(ke, (H, W), dtype=jnp.float32, minval=1.0, maxval=3.0)

    out = jax.block_until_ready(power_broadcast(x, exponent))
    ref = x ** exponent
    assert out.shape == ref.shape and out.dtype == ref.dtype
    assert jnp.allclose(out, ref, rtol=1e-5, atol=1e-5)

    # Scalar non-integer exponent -> SMEM-scalar path (no exponent HBM stream).
    out_s = jax.block_until_ready(power_broadcast(x, jnp.float32(1.7)))
    assert jnp.allclose(out_s, x ** 1.7, rtol=1e-5, atol=1e-5)

    # Static integer exponent -> repeated-squaring VPU path (exact for negative bases).
    x_neg = x - 1.0
    out_i = jax.block_until_ready(power_broadcast(x_neg, 3))
    assert jnp.allclose(out_i, x_neg ** 3, rtol=1e-5, atol=1e-5)

    # General-broadcast fallback (per-channel exponent).
    e_c = jax.random.uniform(kc, (C, 1, 1), dtype=jnp.float32, minval=1.0, maxval=2.0)
    out_c = jax.block_until_ready(power_broadcast(x, e_c))
    assert jnp.allclose(out_c, x ** e_c, rtol=1e-5, atol=1e-5)

    print("KERNEL_OK")
</pallas_src>

<mosaic_0001>
module attributes {stable_mosaic.version = 11 : i64} {
  func.func @kernel(%arg0: i32, %arg1: i32, %arg2: memref<8x256xf32, #tpu.memory_space<vmem>>, %arg3: memref<1x256xf32, #tpu.memory_space<vmem>>, %arg4: memref<8x256xf32, #tpu.memory_space<vmem>>) attributes {dimension_semantics = [#tpu.dimension_semantics<parallel>, #tpu.dimension_semantics<parallel>], iteration_bounds = array<i64: 1, 1>, scalar_prefetch = 0 : i64, scratch_operands = 0 : i64, tpu.core_type = #tpu.core_type<tc>, window_params = [{transform_indices = @transform_0, window_bounds = array<i64: 8, 256>}, {transform_indices = @transform_1, window_bounds = array<i64: 1, 256>}, {transform_indices = @transform_2, window_bounds = array<i64: 8, 256>}]} {
    %c0 = arith.constant 0 : index
    %c0_0 = arith.constant 0 : index
    %0 = vector.load %arg2[%c0, %c0_0] : memref<8x256xf32, #tpu.memory_space<vmem>>, vector<8x256xf32>
    %c0_1 = arith.constant 0 : index
    %c0_2 = arith.constant 0 : index
    %1 = vector.load %arg3[%c0_1, %c0_2] : memref<1x256xf32, #tpu.memory_space<vmem>>, vector<1x256xf32>
    %2 = vector.broadcast %1 : vector<1x256xf32> to vector<8x256xf32>
    %3 = math.powf %0, %2 : vector<8x256xf32>
    %c0_3 = arith.constant 0 : index
    %c0_4 = arith.constant 0 : index
    %4 = vector.load %arg4[%c0_3, %c0_4] : memref<8x256xf32, #tpu.memory_space<vmem>>, vector<8x256xf32>
    tpu.vector_store %arg4[%c0_3, %c0_4], %3 {strides = array<i32>} : memref<8x256xf32, #tpu.memory_space<vmem>>, vector<8x256xf32>,
    return
  }
  func.func @transform_0(%arg0: i32, %arg1: i32) -> (i32, i32) {
    %c0_i32 = arith.constant 0 : i32
    return %arg0, %arg1 : i32, i32
  }
  func.func @transform_1(%arg0: i32, %arg1: i32) -> (i32, i32) {
    %c0_i32 = arith.constant 0 : i32
    %c0_i32_0 = arith.constant 0 : i32
    return %c0_i32, %arg1 : i32, i32
  }
  func.func @transform_2(%arg0: i32, %arg1: i32) -> (i32, i32) {
    %c0_i32 = arith.constant 0 : i32
    return %arg0, %arg1 : i32, i32
  }
}

</mosaic_0001>

<llo_original>
// kernel: tpu_custom_call.1
$region0: #{tpu_custom_call.1}
  #allocation0 [shape = 'u32[]', space=smem, size = 0x4, offset = 0x4, fixed_abs, tag = 'smem constant byte address 0x4 - core index']
  #allocation1 [shape = 'u32[144,128]{1,0:T(1,128)}', space=vmem, size = 0x12000, scoped, tag = 'internal scratch']
  %s0 = inlined_call_operand.hbm [shape: f32[8,256], index: 0, kind: input, shape index: {}]
  %s1 = inlined_call_operand.hbm [shape: f32[1,256], index: 1, kind: input, shape index: {}]
  %s2 = inlined_call_operand.hbm [shape: f32[8,256], index: 2, kind: output, shape index: {}]
  %s3 = sld [smem:[#allocation0]]
  $region26: #{tpu_custom_call.1} parent=0
    _
  %s5 = ssub.s32 1, %s3
  %s6 = scalar_select 0, %s5, %s3
  $region1: #{tpu_custom_call.1} parent=0
    #allocation2 [shape = 'u8[8192]{0}', space=vmem, size = 0x2000, scoped, tag = 'input window, operand 0, single buffered']
    #allocation3 [shape = 's32[1]{0}', space=sflag, size = 0x4, scoped, tag = 'scoped memory for tpu_custom_call.1']
    #allocation4 [shape = 's32[1]{0}', space=sflag, size = 0x4, scoped, tag = 'scoped memory for tpu_custom_call.1']
    #allocation5 [shape = 'u8[1024]{0}', space=vmem, size = 0x400, scoped, tag = 'input window, operand 1, single buffered']
    #allocation6 [shape = 's32[1]{0}', space=sflag, size = 0x4, scoped, tag = 'scoped memory for tpu_custom_call.1']
    #allocation7 [shape = 'u8[8192]{0}', space=vmem, size = 0x2000, scoped, tag = 'output window, operand 0, single buffered']
    %7 = vsyncpa [#allocation3], 0
    %8 = vsyncpa [#allocation6], 0
    %9 = vsyncpa [#allocation4], 0
    // Predicated region
    $region2: #{tpu_custom_call.1} parent=1 // pred_check
      _
    $region3: #{tpu_custom_call.1} parent=1 // pred_check_branch
      %11 = sbr.rel (0) target = $region5
    $region4: #{tpu_custom_call.1} parent=1 // pred_region
      %s13 = ssub.s32 256, 256
      %14 = vsyncadd [#allocation3], %s13
      %s16 = sshll.u32 [#allocation2], 4
      %s17 = int_to_ptr.vmem [resolvable:$true] %s16
      %19 = dma.hbm_to_vmem [thread:$0]  %s0, 256, %s17, [#allocation3]
    $region5: #{tpu_custom_call.1} parent=1 // pred_fallthru
      _
    // Predicated region
    $region6: #{tpu_custom_call.1} parent=1 // pred_check
      _
    $region7: #{tpu_custom_call.1} parent=1 // pred_check_branch
      %21 = sbr.rel (0) target = $region9
    $region8: #{tpu_custom_call.1} parent=1 // pred_region
      %s23 = ssub.s32 32, 32
      %24 = vsyncadd [#allocation6], %s23
      %s26 = sshll.u32 [#allocation5], 4
      %s27 = int_to_ptr.vmem [resolvable:$true] %s26
      %29 = dma.hbm_to_vmem [thread:$0]  %s1, 32, %s27, [#allocation6]
    $region9: #{tpu_custom_call.1} parent=1 // pred_fallthru
      _
    // Predicated region
    $region10: #{tpu_custom_call.1} parent=1 // pred_check
      _
    $region11: #{tpu_custom_call.1} parent=1 // pred_check_branch
      %31 = sbr.rel (0) target = $region13
    $region12: #{tpu_custom_call.1} parent=1 // pred_region
      %32 = dma.done [#allocation3], 256
    $region13: #{tpu_custom_call.1} parent=1 // pred_fallthru
      _
    // Predicated region
    $region14: #{tpu_custom_call.1} parent=1 // pred_check
      _
    $region15: #{tpu_custom_call.1} parent=1 // pred_check_branch
      %34 = sbr.rel (0) target = $region17
    $region16: #{tpu_custom_call.1} parent=1 // pred_region
      %35 = dma.done [#allocation6], 32
    $region17: #{tpu_custom_call.1} parent=1 // pred_fallthru
      _
    %v36 = vld [vmem:[#allocation2] sm:$0xff]
    %v37 = vld [vmem:[#allocation2 + $0x8] sm:$0xff]
    %v38 = vld [vmem:[#allocation5] sm:$0x3]
    %v40 = vlaneseq
    %v41 = vshrl.u32 %v40, 7
    %v42 = vsub.s32 0, %v41
    %v43 = vrot.slane %v38, %v42
    %v44 = vlaneseq
    %v45 = vshrl.u32 %v44, 7
    %v46 = vsub.s32 1, %v45
    %v47 = vrot.slane %v38, %v46
    %v50 = vpow.f32 %v36, %v43
    %v51 = vpow.f32 %v37, %v47
    %52 = vst [vmem:[#allocation7] sm:$0xff] %v50
    %53 = vst [vmem:[#allocation7 + $0x8] sm:$0xff] %v51
    // Predicated region
    $region18: #{tpu_custom_call.1} parent=1 // pred_check
      _
    $region19: #{tpu_custom_call.1} parent=1 // pred_check_branch
      %55 = sbr.rel (0) target = $region21
    $region20: #{tpu_custom_call.1} parent=1 // pred_region
      %s57 = ssub.s32 256, 256
      %58 = vsyncadd [#allocation4], %s57
      %s60 = sshll.u32 [#allocation7], 4
      %s61 = int_to_ptr.vmem [resolvable:$true] %s60
      %63 = dma.vmem_to_hbm [thread:$0]  %s61, 256, %s2, [#allocation4]
    $region21: #{tpu_custom_call.1} parent=1 // pred_fallthru
      _
    // Predicated region
    $region22: #{tpu_custom_call.1} parent=1 // pred_check
      _
    $region23: #{tpu_custom_call.1} parent=1 // pred_check_branch
      %65 = sbr.rel (0) target = $region25
    $region24: #{tpu_custom_call.1} parent=1 // pred_region
      %66 = dma.done [#allocation4], 256
    $region25: #{tpu_custom_call.1} parent=1 // pred_fallthru
      _
    %67 = vsyncpa [#allocation3], 1
    %68 = vsyncpa [#allocation6], 1
    %69 = vsyncpa [#allocation4], 1

</llo_original>
